<compile_context>
chip_gen: v5e
topology: v5e:2x2
jax: 0.10.0
libtpu: 0.0.40
codegen_flags: <defaults>
</compile_context>

<pallas_src>
import jax
import jax.numpy as jnp
from jax.experimental import pallas as pl
from jax.experimental.pallas import tpu as pltpu


# ---------------------------------------------------------------------------
# Kernels (specialized on presence of bias)
# ---------------------------------------------------------------------------
def _scale_bias_kernel(scale_ref, bias_ref, x_ref, o_ref):
    # scale_ref / bias_ref: shape-(1,) f32 scalars in SMEM
    xv = x_ref[...].astype(jnp.float32)
    o_ref[...] = ((xv + bias_ref[0]) * scale_ref[0]).astype(o_ref.dtype)


def _scale_only_kernel(scale_ref, x_ref, o_ref):
    xv = x_ref[...].astype(jnp.float32)
    o_ref[...] = (xv * scale_ref[0]).astype(o_ref.dtype)


# ---------------------------------------------------------------------------
# Layout helpers
# ---------------------------------------------------------------------------
def _pick_cols(total, max_cols=2048):
    """Largest multiple of 128 (<= max_cols) that divides `total`; 0 if none."""
    best = 0
    c = 128
    while c <= max_cols:
        if total % c == 0:
            best = c
        c += 128
    return best


# ---------------------------------------------------------------------------
# Forward wrapper
# ---------------------------------------------------------------------------
def scale_layer_forward(x, scale, bias=None):
    """Pallas ScaleLayer forward: (x + bias) * scale  (bias optional).

    `scale` / `bias` are 0-d (or shape-(1,)) float parameters.  Output dtype
    equals the input dtype; arithmetic is done in f32 inside the kernel.
    """
    orig_shape = x.shape
    orig_dtype = x.dtype
    total = x.size

    # Lane-dense 2D layout: cols is a multiple of 128 (pad only if no clean
    # 128-multiple divisor exists).
    cols = _pick_cols(total)
    pad = 0
    if cols == 0:
        cols = 1024
        pad = (-total) % cols
    flat = x.reshape(-1)
    if pad:
        flat = jnp.pad(flat, (0, pad))
    rows = (total + pad) // cols
    x2d = flat.reshape(rows, cols)

    # Row tile sized so a single tile is <= ~2 MiB: with input+output each
    # double-buffered (4 live tiles) this stays inside v5e's 16 MiB default
    # scoped VMEM and well inside v6e/v7x budgets, keeping 2-deep pipelining.
    itemsize = jnp.dtype(orig_dtype).itemsize
    tile_budget_bytes = 2 * 1024 * 1024
    tr = max(8, (tile_budget_bytes // (cols * itemsize)) // 8 * 8)
    if tr >= rows:
        tr = rows                      # full-rows block (valid even if <8 rows)
        grid = (1,)
    else:
        grid = (pl.cdiv(rows, tr),)

    scale_arr = jnp.asarray(scale, dtype=jnp.float32).reshape(1)
    has_bias = bias is not None

    x_spec = pl.BlockSpec((tr, cols), lambda i: (i, 0))
    o_spec = pl.BlockSpec((tr, cols), lambda i: (i, 0))
    smem_spec = pl.BlockSpec(memory_space=pltpu.SMEM)

    if has_bias:
        bias_arr = jnp.asarray(bias, dtype=jnp.float32).reshape(1)
        kernel = _scale_bias_kernel
        in_specs = [smem_spec, smem_spec, x_spec]
        args = (scale_arr, bias_arr, x2d)
    else:
        kernel = _scale_only_kernel
        in_specs = [smem_spec, x_spec]
        args = (scale_arr, x2d)

    out2d = pl.pallas_call(
        kernel,
        out_shape=jax.ShapeDtypeStruct((rows, cols), orig_dtype),
        grid=grid,
        in_specs=in_specs,
        out_specs=o_spec,
        compiler_params=pltpu.CompilerParams(
            dimension_semantics=("parallel",)),
    )(*args)

    out_flat = out2d.reshape(-1)
    if pad:
        out_flat = out_flat[:total]
    return out_flat.reshape(orig_shape)


def make_scale_layer_params(init_value=20.0, init_bias=0.0, no_scale=False):
    """Mirror ScaleLayer.__init__: returns (scale, bias-or-None)."""
    scale = jnp.float32(1.0) if no_scale else jnp.float32(init_value)
    bias = jnp.float32(init_bias) if init_bias != 0 else None
    return scale, bias
    # TODO(synk): parameters are inference-only values here; autograd/Parameter
    # bookkeeping from the nn.Module has no Pallas equivalent.


# ---------------------------------------------------------------------------
# Demo / correctness check
# ---------------------------------------------------------------------------
if __name__ == "__main__":
    key = jax.random.PRNGKey(0)
    # NCHW feature map, small demo shape.
    x = jax.random.normal(key, (2, 4, 16, 16), dtype=jnp.float32)

    # Default ScaleLayer: scale=20.0, no bias.
    scale, bias = make_scale_layer_params(init_value=20.0, init_bias=0.0)
    y = scale_layer_forward(x, scale, bias)
    y = jax.block_until_ready(y)
    assert y.shape == x.shape and y.dtype == x.dtype
    assert jnp.allclose(y, x * 20.0, rtol=1e-6, atol=1e-6)

    # Variant with a non-zero bias (bias path exercised).
    scale2, bias2 = make_scale_layer_params(init_value=10.0, init_bias=0.5)
    y2 = scale_layer_forward(x, scale2, bias2)
    y2 = jax.block_until_ready(y2)
    assert jnp.allclose(y2, (x + 0.5) * 10.0, rtol=1e-6, atol=1e-6)

    # bf16 input: dtype preserved, compute in f32 inside the kernel.
    x_bf = x.astype(jnp.bfloat16)
    y_bf = jax.block_until_ready(scale_layer_forward(x_bf, scale, bias))
    assert y_bf.dtype == jnp.bfloat16
    ref_bf = (x_bf.astype(jnp.float32) * 20.0).astype(jnp.bfloat16)
    assert jnp.allclose(y_bf.astype(jnp.float32), ref_bf.astype(jnp.float32),
                        rtol=1e-2, atol=1e-2)

    print("KERNEL_OK")
</pallas_src>

<mosaic_0001>
module attributes {stable_mosaic.version = 11 : i64} {
  func.func @_scale_only_kernel(%arg0: i32, %arg1: memref<1xf32, #tpu.memory_space<smem>>, %arg2: memref<1x2048xf32, #tpu.memory_space<vmem>>, %arg3: memref<1x2048xf32, #tpu.memory_space<vmem>>) attributes {dimension_semantics = [#tpu.dimension_semantics<parallel>], iteration_bounds = array<i64: 1>, scalar_prefetch = 0 : i64, scratch_operands = 0 : i64, tpu.core_type = #tpu.core_type<tc>, window_params = [{transform_indices = @transform_0, window_bounds = array<i64: 1>}, {transform_indices = @transform_1, window_bounds = array<i64: 1, 2048>}, {transform_indices = @transform_2, window_bounds = array<i64: 1, 2048>}]} {
    %c0 = arith.constant 0 : index
    %c0_0 = arith.constant 0 : index
    %0 = vector.load %arg2[%c0, %c0_0] : memref<1x2048xf32, #tpu.memory_space<vmem>>, vector<1x2048xf32>
    %c0_1 = arith.constant 0 : index
    %1 = memref.load %arg1[%c0_1] : memref<1xf32, #tpu.memory_space<smem>>
    %2 = vector.broadcast %1 : f32 to vector<1x2048xf32>
    %3 = arith.mulf %0, %2 : vector<1x2048xf32>
    %c0_2 = arith.constant 0 : index
    %c0_3 = arith.constant 0 : index
    %4 = vector.load %arg3[%c0_2, %c0_3] : memref<1x2048xf32, #tpu.memory_space<vmem>>, vector<1x2048xf32>
    tpu.vector_store %arg3[%c0_2, %c0_3], %3 {strides = array<i32>} : memref<1x2048xf32, #tpu.memory_space<vmem>>, vector<1x2048xf32>,
    return
  }
  func.func @transform_0(%arg0: i32) -> i32 {
    %c0_i32 = arith.constant 0 : i32
    %c0_i32_0 = arith.constant 0 : i32
    return %c0_i32 : i32
  }
  func.func @transform_1(%arg0: i32) -> (i32, i32) {
    %c0_i32 = arith.constant 0 : i32
    %c0_i32_0 = arith.constant 0 : i32
    return %arg0, %c0_i32 : i32, i32
  }
  func.func @transform_2(%arg0: i32) -> (i32, i32) {
    %c0_i32 = arith.constant 0 : i32
    %c0_i32_0 = arith.constant 0 : i32
    return %arg0, %c0_i32 : i32, i32
  }
}

</mosaic_0001>

<llo_original>
// kernel: tpu_custom_call.1
$region0: #{tpu_custom_call.1}
  #allocation0 [shape = 'u32[]', space=smem, size = 0x4, offset = 0x4, fixed_abs, tag = 'smem constant byte address 0x4 - core index']
  #allocation1 [shape = 'u32[72,128]{1,0:T(1,128)}', space=vmem, size = 0x9000, scoped, tag = 'internal scratch']
  #allocation2 [shape = 'f32[1]{0:T(128)S(6)}', space=smem, size = 0x200, scoped, tag = 'scoped memory for tpu_custom_call.1']
  %s0 = inlined_call_operand.<no memory space> [shape: f32[1], index: 0, kind: input, shape index: {}]
  %s1 = inlined_call_operand.hbm [shape: f32[1,2048], index: 1, kind: input, shape index: {}]
  %s2 = inlined_call_operand.hbm [shape: f32[1,2048], index: 2, kind: output, shape index: {}]
  %s3 = sld [smem:[#allocation0]]
  $region22: #{tpu_custom_call.1} parent=0
    _
  %s5 = ssub.s32 1, %s3
  %s6 = scalar_select 0, %s5, %s3
  %7 = sst [smem:[#allocation2]] %s0
  $region1: #{tpu_custom_call.1} parent=0
    #allocation3 [shape = 'u8[8192]{0}', space=vmem, size = 0x2000, scoped, tag = 'input window, operand 1, single buffered']
    #allocation4 [shape = 's32[1]{0}', space=sflag, size = 0x4, scoped, tag = 'scoped memory for tpu_custom_call.1']
    #allocation5 [shape = 's32[1]{0}', space=sflag, size = 0x4, scoped, tag = 'scoped memory for tpu_custom_call.1']
    #allocation6 [shape = 'u8[8192]{0}', space=vmem, size = 0x2000, scoped, tag = 'output window, operand 0, single buffered']
    %8 = vsyncpa [#allocation4], 0
    %9 = vsyncpa [#allocation5], 0
    // Predicated region
    $region2: #{tpu_custom_call.1} parent=1 // pred_check
      _
    $region3: #{tpu_custom_call.1} parent=1 // pred_check_branch
      %11 = sbr.rel (0) target = $region5
    $region4: #{tpu_custom_call.1} parent=1 // pred_region
      _
    $region5: #{tpu_custom_call.1} parent=1 // pred_fallthru
      _
    // Predicated region
    $region6: #{tpu_custom_call.1} parent=1 // pred_check
      _
    $region7: #{tpu_custom_call.1} parent=1 // pred_check_branch
      %13 = sbr.rel (0) target = $region9
    $region8: #{tpu_custom_call.1} parent=1 // pred_region
      %15 = vsyncadd [#allocation4], 0
      %s17 = sshll.u32 %s1, 4
      %s18 = int_to_ptr.hbm [resolvable:$true] %s17
      %s19 = sshll.u32 [#allocation3], 4
      %s20 = int_to_ptr.vmem [resolvable:$true] %s19
      %22 = dma.hbm_to_vmem [thread:$0]  %s18, 256, %s20, [#allocation4]
    $region9: #{tpu_custom_call.1} parent=1 // pred_fallthru
      _
    // Predicated region
    $region10: #{tpu_custom_call.1} parent=1 // pred_check
      _
    $region11: #{tpu_custom_call.1} parent=1 // pred_check_branch
      %24 = sbr.rel (0) target = $region13
    $region12: #{tpu_custom_call.1} parent=1 // pred_region
      %26 = dma.done [#allocation4], 256
    $region13: #{tpu_custom_call.1} parent=1 // pred_fallthru
      _
    %v27 = vld [vmem:[#allocation3] sm:$0xff]
    %v28 = vld [vmem:[#allocation3 + $0x8] sm:$0xff]
    %s29 = sld [smem:[#allocation2]]
    %v30 = vstv %s29
    %v31 = vmul.f32 %v27, %v30
    %v32 = vmul.f32 %v28, %v30
    %33 = vst [vmem:[#allocation6] sm:$0xff] %v31
    %34 = vst [vmem:[#allocation6 + $0x8] sm:$0xff] %v32
    // Predicated region
    $region14: #{tpu_custom_call.1} parent=1 // pred_check
      _
    $region15: #{tpu_custom_call.1} parent=1 // pred_check_branch
      %36 = sbr.rel (0) target = $region17
    $region16: #{tpu_custom_call.1} parent=1 // pred_region
      %38 = vsyncadd [#allocation5], 0
      %s40 = sshll.u32 [#allocation6], 4
      %s41 = int_to_ptr.vmem [resolvable:$true] %s40
      %s42 = sshll.u32 %s2, 4
      %s43 = int_to_ptr.hbm [resolvable:$true] %s42
      %45 = dma.vmem_to_hbm [thread:$0]  %s41, 256, %s43, [#allocation5]
    $region17: #{tpu_custom_call.1} parent=1 // pred_fallthru
      _
    // Predicated region
    $region18: #{tpu_custom_call.1} parent=1 // pred_check
      _
    $region19: #{tpu_custom_call.1} parent=1 // pred_check_branch
      %47 = sbr.rel (0) target = $region21
    $region20: #{tpu_custom_call.1} parent=1 // pred_region
      %49 = dma.done [#allocation5], 256
    $region21: #{tpu_custom_call.1} parent=1 // pred_fallthru
      _
    %50 = vsyncpa [#allocation4], 1
    %51 = vsyncpa [#allocation5], 1

</llo_original>
